<compile_context>
chip_gen: v7x
topology: tpu7x:2x2x1
jax: 0.10.0
libtpu: 0.0.40
codegen_flags: <defaults>
</compile_context>

<pallas_src>
import numpy as np
import jax
import jax.numpy as jnp
from jax.experimental import pallas as pl
from jax.experimental.pallas import tpu as pltpu


# ----------------------------------------------------------------------------
# Kernel
# ----------------------------------------------------------------------------
def _tree_kernel(x_ref, w_ref, b_ref, p0_ref, p1_ref, mu_ref):
    # logits = x @ W' + b   (feature-mask selection already folded into W')
    logits = jnp.dot(x_ref[...], w_ref[...],
                     preferred_element_type=jnp.float32) + b_ref[...]

    # Numerically stable log-sigmoid of +/- logits (one exp + one log, EUP).
    neg_abs = -jnp.abs(logits)
    log1pexp = jnp.log(1.0 + jnp.exp(neg_abs))
    lsp = jnp.minimum(logits, 0.0) - log1pexp        # log sigmoid(z)
    lsn = jnp.minimum(-logits, 0.0) - log1pexp       # log (1 - sigmoid(z))

    # All `depth` routing factors summed in log space via one lane-dense
    # matmul pair; P0/P1 columns are zero-padded to the 128-aligned output
    # width, so no sub-128-lane slicing or per-depth multiply chain remains.
    logmu = (jnp.dot(lsp, p0_ref[...], preferred_element_type=jnp.float32)
             + jnp.dot(lsn, p1_ref[...], preferred_element_type=jnp.float32))
    mu_ref[...] = jnp.exp(logmu).astype(mu_ref.dtype)


# ----------------------------------------------------------------------------
# Tiling helper
# ----------------------------------------------------------------------------
def _choose_block_rows(B, n_in, n_leaf, n_pad, cbytes, vmem_budget_bytes):
    """Largest batch tile whose double-buffered streams + resident weights fit."""
    resident = 2 * (n_in * n_leaf * cbytes        # W'   (default double buffer)
                    + 2 * n_leaf * n_pad * 4      # P0 + P1
                    + 8 * 128 * 4)                # bias (one padded tile)
    per_row = (2 * n_in * cbytes                  # x tile, double-buffered
               + 2 * n_pad * 4                    # mu tile, double-buffered
               + (6 * n_leaf + 3 * n_pad) * 4)    # live f32 temporaries in body
    tb = (int(0.85 * vmem_budget_bytes) - resident) // max(per_row, 1)
    tb = int(max(8, min(tb, 4096)))
    tb -= tb % 8
    if B <= tb:
        if B >= 16:
            # keep >= 2 grid steps so both v7x TensorCores get work
            tb = min(tb, ((B + 1) // 2 + 7) // 8 * 8)
        else:
            tb = B            # single full-batch tile (full-dim block is legal)
    return tb


# ----------------------------------------------------------------------------
# Wrapper
# ----------------------------------------------------------------------------
def tree_forward(x, w_fused, b, p0, p1, n_leaf, *,
                 block_rows=None,
                 compute_dtype=jnp.bfloat16,
                 vmem_budget_bytes=48 * 1024 * 1024):
    """Route-probability forward pass.

    x:       [B, n_in]           input features
    w_fused: [n_in, n_leaf]      = feature_mask @ W  (exact fold)
    b:       [1, n_leaf]         linear bias
    p0, p1:  [n_leaf, n_pad]     {0,1} log-space routing selection matrices
    returns  [B, n_leaf] float32 route probabilities
    """
    B, n_in = x.shape
    n_pad = p0.shape[1]

    # Narrow HBM/MXU operands; accumulation and all elementwise math stay f32.
    if x.dtype != compute_dtype:
        x = x.astype(compute_dtype)
    if w_fused.dtype != compute_dtype:
        w_fused = w_fused.astype(compute_dtype)

    cbytes = jnp.dtype(compute_dtype).itemsize
    tb = block_rows if block_rows is not None else _choose_block_rows(
        B, n_in, n_leaf, n_pad, cbytes, vmem_budget_bytes)
    grid = (pl.cdiv(B, tb),)

    resident = lambda i: (0, 0)     # weights / routing matrices stay in VMEM
    # TODO(synk): for very deep trees (depth >= 9) keep P0/P1 in HBM (pl.ANY)
    # or single-buffer them (pipeline_mode=pl.Buffered(1)) to stay inside
    # v7x's 64 MiB VMEM; irrelevant at the small depths exercised here.
    mu_pad = pl.pallas_call(
        _tree_kernel,
        out_shape=jax.ShapeDtypeStruct((B, n_pad), jnp.float32),
        grid=grid,
        in_specs=[
            pl.BlockSpec((tb, n_in), lambda i: (i, 0)),      # x batch tiles
            pl.BlockSpec((n_in, n_leaf), resident),          # W'
            pl.BlockSpec((1, n_leaf), resident),             # bias
            pl.BlockSpec((n_leaf, n_pad), resident),         # P0
            pl.BlockSpec((n_leaf, n_pad), resident),         # P1
        ],
        out_specs=pl.BlockSpec((tb, n_pad), lambda i: (i, 0)),
        compiler_params=pltpu.CompilerParams(
            dimension_semantics=("parallel",),               # v7x megacore
            vmem_limit_bytes=int(vmem_budget_bytes),
        ),
    )(x, w_fused, b, p0, p1)

    # Padded lanes hold exp(0) = 1; drop them.  (A downstream `mu @ pi`
    # consumer can keep the padded output and zero-pad pi's rows instead.)
    return mu_pad[:, :n_leaf]


# ----------------------------------------------------------------------------
# Constant construction (deterministic, wrapper-side algebra)
# ----------------------------------------------------------------------------
def build_log_routing_matrices(depth, n_pad=None):
    """{0,1} matrices P0/P1 [n_leaf, n_pad] with
         logmu = logsigmoid(z) @ P0 + logsigmoid(-z) @ P1
       reproducing the tree routing product; leaf axis zero-padded to n_pad."""
    n_leaf = 2 ** depth
    if n_pad is None:
        n_pad = max(128, ((n_leaf + 127) // 128) * 128)
    p0 = np.zeros((n_leaf, n_pad), np.float32)
    p1 = np.zeros((n_leaf, n_pad), np.float32)
    for leaf in range(n_leaf):
        for k in range(depth):
            prefix = leaf >> (depth - k)
            node = (1 << k) + prefix                 # decision node at layer k
            bit = (leaf >> (depth - 1 - k)) & 1      # left (0) / right (1)
            if bit == 0:
                p0[node, leaf] += 1.0
            else:
                p1[node, leaf] += 1.0
    return p0, p1


def reference_forward(x, feature_mask, w, b, depth):
    """Pure-JAX reference mirroring the PyTorch loop exactly."""
    n_leaf = 2 ** depth
    B_ = x.shape[0]
    feats = x @ feature_mask
    d = jax.nn.sigmoid(feats @ w + b)                # [B, n_leaf]
    dec = jnp.stack([d, 1.0 - d], axis=2)            # [B, n_leaf, 2]
    mu = jnp.ones((B_, 1, 1), dtype=x.dtype)
    begin, end = 1, 2
    for n_layer in range(depth):
        mu = jnp.repeat(mu.reshape(B_, -1, 1), 2, axis=2)
        mu = mu * dec[:, begin:end, :]
        begin = end
        end = begin + 2 ** (n_layer + 1)
    return mu.reshape(B_, n_leaf)


# ----------------------------------------------------------------------------
if __name__ == "__main__":
    # Tree(depth=3, n_in_feature=32, used_feature_rate=0.5, n_class=4)
    depth = 3
    n_in_feature = 32
    used_feature_rate = 0.5
    n_leaf = 2 ** depth
    n_used = int(n_in_feature * used_feature_rate)
    batch = 8

    key = jax.random.PRNGKey(0)
    kx, kperm, kw, kb = jax.random.split(key, 4)

    # Input: [batch, n_in_feature]
    x = jax.random.normal(kx, (batch, n_in_feature), dtype=jnp.float32)

    # feature_mask: onehot(n_in)[using_idx].T  -> [n_in_feature, n_used]
    using_idx = np.asarray(jax.random.permutation(kperm, n_in_feature))[:n_used]
    feature_mask = jnp.asarray(np.eye(n_in_feature, dtype=np.float32)[using_idx].T)

    # nn.Linear(n_used, n_leaf): store weight transposed -> [n_used, n_leaf]
    lim = 1.0 / np.sqrt(n_used)
    w = jax.random.uniform(kw, (n_used, n_leaf), jnp.float32, -lim, lim)
    b = jax.random.uniform(kb, (1, n_leaf), jnp.float32, -lim, lim)

    # Wrapper-side algebra (exact): fold feature mask into the linear weight,
    # and build the {0,1} log-space routing selection matrices (lane-padded).
    w_fused = feature_mask @ w                        # [n_in_feature, n_leaf]
    p0_np, p1_np = build_log_routing_matrices(depth)  # [n_leaf, 128] each
    p0 = jnp.asarray(p0_np)
    p1 = jnp.asarray(p1_np)

    mu_ref = reference_forward(x, feature_mask, w, b, depth)

    # 1) default path: bf16 x / W' operands (recommended on v5e/v6e/v7x)
    mu_bf16 = jax.block_until_ready(
        tree_forward(x, w_fused, b, p0, p1, n_leaf))
    np.testing.assert_allclose(np.asarray(mu_bf16), np.asarray(mu_ref),
                               rtol=2e-2, atol=2e-2)
    np.testing.assert_allclose(np.asarray(mu_bf16).sum(axis=1),
                               np.ones(batch), rtol=5e-2, atol=5e-2)

    # 2) f32 path: demonstrates the algebraic restructuring is (near-)exact
    mu_f32 = jax.block_until_ready(
        tree_forward(x, w_fused, b, p0, p1, n_leaf,
                     compute_dtype=jnp.float32))
    np.testing.assert_allclose(np.asarray(mu_f32), np.asarray(mu_ref),
                               rtol=1e-4, atol=1e-4)
    np.testing.assert_allclose(np.asarray(mu_f32).sum(axis=1),
                               np.ones(batch), rtol=1e-4, atol=1e-4)

    print("KERNEL_OK")
</pallas_src>

<mosaic_0001>
module attributes {stable_mosaic.version = 11 : i64} {
  func.func @_tree_kernel(%arg0: i32, %arg1: memref<8x32xbf16, #tpu.memory_space<vmem>>, %arg2: memref<32x8xbf16, #tpu.memory_space<vmem>>, %arg3: memref<1x8xf32, #tpu.memory_space<vmem>>, %arg4: memref<8x128xf32, #tpu.memory_space<vmem>>, %arg5: memref<8x128xf32, #tpu.memory_space<vmem>>, %arg6: memref<8x128xf32, #tpu.memory_space<vmem>>) attributes {dimension_semantics = [#tpu.dimension_semantics<parallel>], iteration_bounds = array<i64: 1>, scalar_prefetch = 0 : i64, scratch_operands = 0 : i64, tpu.core_type = #tpu.core_type<tc>, window_params = [{transform_indices = @transform_0, window_bounds = array<i64: 8, 32>}, {pipeline_mode = #tpu.pipeline_mode<synchronous>, transform_indices = @transform_1, window_bounds = array<i64: 32, 8>}, {pipeline_mode = #tpu.pipeline_mode<synchronous>, transform_indices = @transform_2, window_bounds = array<i64: 1, 8>}, {pipeline_mode = #tpu.pipeline_mode<synchronous>, transform_indices = @transform_3, window_bounds = array<i64: 8, 128>}, {pipeline_mode = #tpu.pipeline_mode<synchronous>, transform_indices = @transform_4, window_bounds = array<i64: 8, 128>}, {transform_indices = @transform_5, window_bounds = array<i64: 8, 128>}]} {
    %c0 = arith.constant 0 : index
    %c0_0 = arith.constant 0 : index
    %0 = vector.load %arg1[%c0, %c0_0] : memref<8x32xbf16, #tpu.memory_space<vmem>>, vector<8x32xbf16>
    %c0_1 = arith.constant 0 : index
    %c0_2 = arith.constant 0 : index
    %1 = vector.load %arg2[%c0_1, %c0_2] : memref<32x8xbf16, #tpu.memory_space<vmem>>, vector<32x8xbf16>
    %cst = arith.constant dense<0.000000e+00> : vector<8x8xf32>
    %2 = tpu.matmul %0, %1, %cst {dimension_numbers = #tpu.dot_dimension_numbers<[1], [0], [0], [1], [0, 0, 1, 1], [], []>} : vector<8x32xbf16>, vector<32x8xbf16>, vector<8x8xf32> -> vector<8x8xf32>
    %c0_3 = arith.constant 0 : index
    %c0_4 = arith.constant 0 : index
    %3 = vector.load %arg3[%c0_3, %c0_4] : memref<1x8xf32, #tpu.memory_space<vmem>>, vector<1x8xf32>
    %4 = vector.broadcast %3 : vector<1x8xf32> to vector<8x8xf32>
    %5 = arith.addf %2, %4 : vector<8x8xf32>
    %6 = math.absf %5 : vector<8x8xf32>
    %cst_5 = arith.constant 0.000000e+00 : f32
    %7 = vector.broadcast %cst_5 : f32 to vector<8x8xf32>
    %8 = arith.subf %7, %6 : vector<8x8xf32>
    %9 = math.exp %8 : vector<8x8xf32>
    %cst_6 = arith.constant 1.000000e+00 : f32
    %10 = vector.broadcast %cst_6 : f32 to vector<8x8xf32>
    %11 = arith.addf %10, %9 : vector<8x8xf32>
    %12 = math.log %11 : vector<8x8xf32>
    %cst_7 = arith.constant 0.000000e+00 : f32
    %13 = vector.broadcast %cst_7 : f32 to vector<8x8xf32>
    %14 = arith.minimumf %5, %13 : vector<8x8xf32>
    %15 = arith.subf %14, %12 : vector<8x8xf32>
    %cst_8 = arith.constant 0.000000e+00 : f32
    %16 = vector.broadcast %cst_8 : f32 to vector<8x8xf32>
    %17 = arith.subf %16, %5 : vector<8x8xf32>
    %cst_9 = arith.constant 0.000000e+00 : f32
    %18 = vector.broadcast %cst_9 : f32 to vector<8x8xf32>
    %19 = arith.minimumf %17, %18 : vector<8x8xf32>
    %20 = arith.subf %19, %12 : vector<8x8xf32>
    %c0_10 = arith.constant 0 : index
    %c0_11 = arith.constant 0 : index
    %21 = vector.load %arg4[%c0_10, %c0_11] : memref<8x128xf32, #tpu.memory_space<vmem>>, vector<8x128xf32>
    %cst_12 = arith.constant dense<0.000000e+00> : vector<8x128xf32>
    %22 = tpu.matmul %15, %21, %cst_12 {dimension_numbers = #tpu.dot_dimension_numbers<[1], [0], [0], [1], [0, 0, 1, 1], [], []>} : vector<8x8xf32>, vector<8x128xf32>, vector<8x128xf32> -> vector<8x128xf32>
    %c0_13 = arith.constant 0 : index
    %c0_14 = arith.constant 0 : index
    %23 = vector.load %arg5[%c0_13, %c0_14] : memref<8x128xf32, #tpu.memory_space<vmem>>, vector<8x128xf32>
    %cst_15 = arith.constant dense<0.000000e+00> : vector<8x128xf32>
    %24 = tpu.matmul %20, %23, %cst_15 {dimension_numbers = #tpu.dot_dimension_numbers<[1], [0], [0], [1], [0, 0, 1, 1], [], []>} : vector<8x8xf32>, vector<8x128xf32>, vector<8x128xf32> -> vector<8x128xf32>
    %25 = arith.addf %22, %24 : vector<8x128xf32>
    %26 = math.exp %25 : vector<8x128xf32>
    %c0_16 = arith.constant 0 : index
    %c0_17 = arith.constant 0 : index
    %27 = vector.load %arg6[%c0_16, %c0_17] : memref<8x128xf32, #tpu.memory_space<vmem>>, vector<8x128xf32>
    tpu.vector_store %arg6[%c0_16, %c0_17], %26 {strides = array<i32>} : memref<8x128xf32, #tpu.memory_space<vmem>>, vector<8x128xf32>,
    return
  }
  func.func @transform_0(%arg0: i32) -> (i32, i32) {
    %c0_i32 = arith.constant 0 : i32
    %c0_i32_0 = arith.constant 0 : i32
    return %arg0, %c0_i32 : i32, i32
  }
  func.func @transform_1(%arg0: i32) -> (i32, i32) {
    %c0_i32 = arith.constant 0 : i32
    %c0_i32_0 = arith.constant 0 : i32
    %c0_i32_1 = arith.constant 0 : i32
    return %c0_i32, %c0_i32_0 : i32, i32
  }
  func.func @transform_2(%arg0: i32) -> (i32, i32) {
    %c0_i32 = arith.constant 0 : i32
    %c0_i32_0 = arith.constant 0 : i32
    %c0_i32_1 = arith.constant 0 : i32
    return %c0_i32, %c0_i32_0 : i32, i32
  }
  func.func @transform_3(%arg0: i32) -> (i32, i32) {
    %c0_i32 = arith.constant 0 : i32
    %c0_i32_0 = arith.constant 0 : i32
    %c0_i32_1 = arith.constant 0 : i32
    return %c0_i32, %c0_i32_0 : i32, i32
  }
  func.func @transform_4(%arg0: i32) -> (i32, i32) {
    %c0_i32 = arith.constant 0 : i32
    %c0_i32_0 = arith.constant 0 : i32
    %c0_i32_1 = arith.constant 0 : i32
    return %c0_i32, %c0_i32_0 : i32, i32
  }
  func.func @transform_5(%arg0: i32) -> (i32, i32) {
    %c0_i32 = arith.constant 0 : i32
    %c0_i32_0 = arith.constant 0 : i32
    return %arg0, %c0_i32 : i32, i32
  }
}

</mosaic_0001>

<llo_original>
// kernel: tpu_custom_call.1
$region0: #{tpu_custom_call.1}
  #allocation0 [shape = 'u32[]', space=smem, size = 0x4, offset = 0x4, fixed_abs, tag = 'smem constant byte address 0x4 - core index']
  #allocation1 [shape = 'u32[144,128]{1,0:T(1,128)}', space=vmem, size = 0x12000, scoped, tag = 'internal scratch']
  %s0 = inlined_call_operand.vmem [shape: bf16[8,32], index: 0, kind: input, shape index: {}]
  %s1 = inlined_call_operand.vmem [shape: bf16[32,8], index: 1, kind: input, shape index: {}]
  %s2 = inlined_call_operand.vmem [shape: f32[1,8], index: 2, kind: input, shape index: {}]
  %s3 = inlined_call_operand.vmem [shape: f32[8,128], index: 3, kind: input, shape index: {}]
  %s4 = inlined_call_operand.vmem [shape: f32[8,128], index: 4, kind: input, shape index: {}]
  %s5 = inlined_call_operand.hbm [shape: f32[8,128], index: 5, kind: output, shape index: {}]
  %s6 = sld [smem:[#allocation0]]
  $region30: #{tpu_custom_call.1} parent=0
    _
  %s8 = ssub.s32 1, %s6
  %s9 = scalar_select 0, %s8, %s6
  $region1: #{tpu_custom_call.1} parent=0
    #allocation2 [shape = 'u8[4096]{0}', space=vmem, size = 0x1000, scoped, tag = 'output window, operand 0, single buffered']
    #allocation3 [shape = 's32[1]{0}', space=sflag, size = 0x4, scoped, tag = 'scoped memory for tpu_custom_call.1']
    %10 = vsyncpa [#allocation3], 0
    // Predicated region
    $region2: #{tpu_custom_call.1} parent=1 // pred_check
      _
    $region3: #{tpu_custom_call.1} parent=1 // pred_check_branch
      %12 = sbr.rel (0) target = $region5
    $region4: #{tpu_custom_call.1} parent=1 // pred_region
      _
    $region5: #{tpu_custom_call.1} parent=1 // pred_fallthru
      _
    // Predicated region
    $region6: #{tpu_custom_call.1} parent=1 // pred_check
      _
    $region7: #{tpu_custom_call.1} parent=1 // pred_check_branch
      %14 = sbr.rel (0) target = $region9
    $region8: #{tpu_custom_call.1} parent=1 // pred_region
      _
    $region9: #{tpu_custom_call.1} parent=1 // pred_fallthru
      _
    // Predicated region
    $region10: #{tpu_custom_call.1} parent=1 // pred_check
      _
    $region11: #{tpu_custom_call.1} parent=1 // pred_check_branch
      %16 = sbr.rel (0) target = $region13
    $region12: #{tpu_custom_call.1} parent=1 // pred_region
      _
    $region13: #{tpu_custom_call.1} parent=1 // pred_fallthru
      _
    // Predicated region
    $region14: #{tpu_custom_call.1} parent=1 // pred_check
      _
    $region15: #{tpu_custom_call.1} parent=1 // pred_check_branch
      %18 = sbr.rel (0) target = $region17
    $region16: #{tpu_custom_call.1} parent=1 // pred_region
      _
    $region17: #{tpu_custom_call.1} parent=1 // pred_fallthru
      _
    // Predicated region
    $region18: #{tpu_custom_call.1} parent=1 // pred_check
      _
    $region19: #{tpu_custom_call.1} parent=1 // pred_check_branch
      %20 = sbr.rel (0) target = $region21
    $region20: #{tpu_custom_call.1} parent=1 // pred_region
      _
    $region21: #{tpu_custom_call.1} parent=1 // pred_fallthru
      _
    %v22 = vld [vmem:[%s0] sm:$0xf]
    %v23 = vld [vmem:[%s1] sm:$0xf]
    %v24 = vld [vmem:[%s1 + $0x4] sm:$0xf]
    %v25 = vld [vmem:[%s1 + $0x8] sm:$0xf]
    %v26 = vld [vmem:[%s1 + $0xc] sm:$0xf]
    %v27 = vld [vmem:[%s2] sm:$0x1]
    %v29 = vlaneseq
    %v30 = vshrl.u32 %v29, 7
    %v31 = vsub.s32 0, %v30
    %v32 = vrot.slane %v27, %v31
    %v38 = vunpack.c.l.b16 %v23
    %v39 = vunpack.c.l.b16 %v24
    %v40 = vunpack.c.l.b16 %v25
    %v41 = vunpack.c.l.b16 %v26
    %v42 = vpack.c.b16 %v39, %v38
    %v43 = vpack.c.b16 %v41, %v40
    %vm46 = vcmask 261120
    %v48 = vsel %vm46, %v22, 0
    %50 = vmatprep.subr.bf16.mxu0 0
    %51 = vmatpush1.bf16.msra.mxu0 %v42
    %52 = vmatprep.subr.bf16.mxu0 0
    %53 = vmatpush1.bf16.msra.mxu0 %v43
    %54 = vmatprep.subr.bf16.mxu0 0
    %55 = vmatpush1.bf16.msra.mxu0 0
    %56 = vmatprep.subr.bf16.mxu0 0
    %57 = vmatpush1.bf16.msra.mxu0 0
    %58 = vmatprep.subr.bf16.mxu0 0
    %59 = vmatpush1.bf16.msra.mxu0 0
    %60 = vmatprep.subr.bf16.mxu0 0
    %61 = vmatpush1.bf16.msra.mxu0 0
    %62 = vmatprep.subr.bf16.mxu0 0
    %63 = vmatpush1.bf16.msra.mxu0 0
    %64 = vmatprep.subr.bf16.mxu0 0
    %65 = vmatpush1.bf16.msra.mxu0 0
    %66 = vmatprep.subr.bf16.mxu0 0
    %67 = vmatpush1.bf16.msra.mxu0 0
    %68 = vmatprep.subr.bf16.mxu0 0
    %69 = vmatpush1.bf16.msra.mxu0 0
    %70 = vmatprep.subr.bf16.mxu0 0
    %71 = vmatpush1.bf16.msra.mxu0 0
    %72 = vmatprep.subr.bf16.mxu0 0
    %73 = vmatpush1.bf16.msra.mxu0 0
    %74 = vmatprep.subr.bf16.mxu0 0
    %75 = vmatpush1.bf16.msra.mxu0 0
    %76 = vmatprep.subr.bf16.mxu0 0
    %77 = vmatpush1.bf16.msra.mxu0 0
    %78 = vmatprep.subr.bf16.mxu0 0
    %79 = vmatpush1.bf16.msra.mxu0 0
    %80 = vmatprep.subr.bf16.mxu0 0
    %81 = vmatpush1.bf16.msra.mxu0 0
    %82 = vmatprep.mubr.bf16.mxu0 0
    %83 = vmatmul.mubr.bf16.gmra.mrb[0].mxu0 %v48
    %v84 = vpop.f32.mrb[0].mxu0
    %v85 = vadd.f32 %v32, %v84
    %v86 = vpop.f32.mrb[0].mxu0
    %v87 = vpop.f32.mrb[0].mxu0
    %v88 = vpop.f32.mrb[0].mxu0
    %89 = vdwg.mxu0
    %v90 = vand.u32 2147483647, %v85
    %v91 = vsub.f32 0.0, %v90
    %v92 = vmul.f32 %v91, 1.442695
    %v93 = vpow.pop %v92
    %v94 = vadd.f32 %v93, 1.0
    %v95 = vlog2.pop %v94
    %v96 = vmul.f32 %v95, 0.6931472
    %v97 = vmin.f32 %v85, 0.0
    %v98 = vsub.f32 %v97, %v96
    %v99 = vsub.f32 0.0, %v85
    %v100 = vmin.f32 %v99, 0.0
    %v101 = vsub.f32 %v100, %v96
    %v102 = vld [vmem:[%s3] sm:$0xff]
    %v103 = vld [vmem:[%s4] sm:$0xff]
    %vm104 = vcmask 64512
    %v106 = vsel %vm104, %v101, 0
    %108 = vmatprep.subr.mxu0 0.0
    %109 = vmatpush1.msra.mxu0 %v103
    %110 = vmatprep.subr.mxu0 0.0
    %111 = vmatpush1.msra.mxu0 0.0
    %112 = vmatprep.subr.mxu0 0.0
    %113 = vmatpush1.msra.mxu0 0.0
    %114 = vmatprep.subr.mxu0 0.0
    %115 = vmatpush1.msra.mxu0 0.0
    %116 = vmatprep.subr.mxu0 0.0
    %117 = vmatpush1.msra.mxu0 0.0
    %118 = vmatprep.subr.mxu0 0.0
    %119 = vmatpush1.msra.mxu0 0.0
    %120 = vmatprep.subr.mxu0 0.0
    %121 = vmatpush1.msra.mxu0 0.0
    %122 = vmatprep.subr.mxu0 0.0
    %123 = vmatpush1.msra.mxu0 0.0
    %124 = vmatprep.subr.mxu0 0.0
    %125 = vmatpush1.msra.mxu0 0.0
    %126 = vmatprep.subr.mxu0 0.0
    %127 = vmatpush1.msra.mxu0 0.0
    %128 = vmatprep.subr.mxu0 0.0
    %129 = vmatpush1.msra.mxu0 0.0
    %130 = vmatprep.subr.mxu0 0.0
    %131 = vmatpush1.msra.mxu0 0.0
    %132 = vmatprep.subr.mxu0 0.0
    %133 = vmatpush1.msra.mxu0 0.0
    %134 = vmatprep.subr.mxu0 0.0
    %135 = vmatpush1.msra.mxu0 0.0
    %136 = vmatprep.subr.mxu0 0.0
    %137 = vmatpush1.msra.mxu0 0.0
    %138 = vmatprep.subr.mxu0 0.0
    %139 = vmatpush1.msra.mxu0 0.0
    %140 = vmatprep.subr.mxu0 0.0
    %141 = vmatpush1.msra.mxu0 0.0
    %142 = vmatprep.subr.mxu0 0.0
    %143 = vmatpush1.msra.mxu0 0.0
    %144 = vmatprep.subr.mxu0 0.0
    %145 = vmatpush1.msra.mxu0 0.0
    %146 = vmatprep.subr.mxu0 0.0
    %147 = vmatpush1.msra.mxu0 0.0
    %148 = vmatprep.subr.mxu0 0.0
    %149 = vmatpush1.msra.mxu0 0.0
    %150 = vmatprep.subr.mxu0 0.0
    %151 = vmatpush1.msra.mxu0 0.0
    %152 = vmatprep.subr.mxu0 0.0
    %153 = vmatpush1.msra.mxu0 0.0
    %154 = vmatprep.subr.mxu0 0.0
    %155 = vmatpush1.msra.mxu0 0.0
    %156 = vmatprep.subr.mxu0 0.0
    %157 = vmatpush1.msra.mxu0 0.0
    %158 = vmatprep.subr.mxu0 0.0
    %159 = vmatpush1.msra.mxu0 0.0
    %160 = vmatprep.subr.mxu0 0.0
    %161 = vmatpush1.msra.mxu0 0.0
    %162 = vmatprep.subr.mxu0 0.0
    %163 = vmatpush1.msra.mxu0 0.0
    %164 = vmatprep.subr.mxu0 0.0
    %165 = vmatpush1.msra.mxu0 0.0
    %166 = vmatprep.subr.mxu0 0.0
    %167 = vmatpush1.msra.mxu0 0.0
    %168 = vmatprep.subr.mxu0 0.0
    %169 = vmatpush1.msra.mxu0 0.0
    %170 = vmatprep.subr.mxu0 0.0
    %171 = vmatpush1.msra.mxu0 0.0
    %172 = vmatprep.mubr.f32.mxu0 0.0
    %173 = vmatmul.mubr.f32.gmra.mrb[0].mxu0 %v106
    %v174 = vpop.f32.mrb[0].mxu0
    %v175 = vadd.f32 0.0, %v174
    %v176 = vpop.f32.mrb[0].mxu0
    %177 = vdwg.mxu0
    %v179 = vsel %vm104, %v98, 0
    %181 = vmatprep.subr.mxu0 0.0
    %182 = vmatpush1.msra.mxu0 %v102
    %183 = vmatprep.subr.mxu0 0.0
    %184 = vmatpush1.msra.mxu0 0.0
    %185 = vmatprep.subr.mxu0 0.0
    %186 = vmatpush1.msra.mxu0 0.0
    %187 = vmatprep.subr.mxu0 0.0
    %188 = vmatpush1.msra.mxu0 0.0
    %189 = vmatprep.subr.mxu0 0.0
    %190 = vmatpush1.msra.mxu0 0.0
    %191 = vmatprep.subr.mxu0 0.0
    %192 = vmatpush1.msra.mxu0 0.0
    %193 = vmatprep.subr.mxu0 0.0
    %194 = vmatpush1.msra.mxu0 0.0
    %195 = vmatprep.subr.mxu0 0.0
    %196 = vmatpush1.msra.mxu0 0.0
    %197 = vmatprep.subr.mxu0 0.0
    %198 = vmatpush1.msra.mxu0 0.0
    %199 = vmatprep.subr.mxu0 0.0
    %200 = vmatpush1.msra.mxu0 0.0
    %201 = vmatprep.subr.mxu0 0.0
    %202 = vmatpush1.msra.mxu0 0.0
    %203 = vmatprep.subr.mxu0 0.0
    %204 = vmatpush1.msra.mxu0 0.0
    %205 = vmatprep.subr.mxu0 0.0
    %206 = vmatpush1.msra.mxu0 0.0
    %207 = vmatprep.subr.mxu0 0.0
    %208 = vmatpush1.msra.mxu0 0.0
    %209 = vmatprep.subr.mxu0 0.0
    %210 = vmatpush1.msra.mxu0 0.0
    %211 = vmatprep.subr.mxu0 0.0
    %212 = vmatpush1.msra.mxu0 0.0
    %213 = vmatprep.subr.mxu0 0.0
    %214 = vmatpush1.msra.mxu0 0.0
    %215 = vmatprep.subr.mxu0 0.0
    %216 = vmatpush1.msra.mxu0 0.0
    %217 = vmatprep.subr.mxu0 0.0
    %218 = vmatpush1.msra.mxu0 0.0
    %219 = vmatprep.subr.mxu0 0.0
    %220 = vmatpush1.msra.mxu0 0.0
    %221 = vmatprep.subr.mxu0 0.0
    %222 = vmatpush1.msra.mxu0 0.0
    %223 = vmatprep.subr.mxu0 0.0
    %224 = vmatpush1.msra.mxu0 0.0
    %225 = vmatprep.subr.mxu0 0.0
    %226 = vmatpush1.msra.mxu0 0.0
    %227 = vmatprep.subr.mxu0 0.0
    %228 = vmatpush1.msra.mxu0 0.0
    %229 = vmatprep.subr.mxu0 0.0
    %230 = vmatpush1.msra.mxu0 0.0
    %231 = vmatprep.subr.mxu0 0.0
    %232 = vmatpush1.msra.mxu0 0.0
    %233 = vmatprep.subr.mxu0 0.0
    %234 = vmatpush1.msra.mxu0 0.0
    %235 = vmatprep.subr.mxu0 0.0
    %236 = vmatpush1.msra.mxu0 0.0
    %237 = vmatprep.subr.mxu0 0.0
    %238 = vmatpush1.msra.mxu0 0.0
    %239 = vmatprep.subr.mxu0 0.0
    %240 = vmatpush1.msra.mxu0 0.0
    %241 = vmatprep.subr.mxu0 0.0
    %242 = vmatpush1.msra.mxu0 0.0
    %243 = vmatprep.subr.mxu0 0.0
    %244 = vmatpush1.msra.mxu0 0.0
    %245 = vmatprep.mubr.f32.mxu0 0.0
    %246 = vmatmul.mubr.f32.gmra.mrb[0].mxu0 %v179
    %v247 = vpop.f32.mrb[0].mxu0
    %v248 = vadd.f32 %v175, %v247
    %v249 = vpop.f32.mrb[0].mxu0
    %250 = vdwg.mxu0
    %v251 = vmul.f32 %v248, 1.442695
    %v252 = vpow.pop %v251
    %253 = vst [vmem:[#allocation2] sm:$0xff] %v252
    // Predicated region
    $region22: #{tpu_custom_call.1} parent=1 // pred_check
      _
    $region23: #{tpu_custom_call.1} parent=1 // pred_check_branch
      %255 = sbr.rel (0) target = $region25
    $region24: #{tpu_custom_call.1} parent=1 // pred_region
      %s257 = ssub.s32 128, 128
      %258 = vsyncadd [#allocation3], %s257
      %s260 = sshll.u32 [#allocation2], 4
      %s261 = int_to_ptr.vmem [resolvable:$true] %s260
      %263 = dma.vmem_to_hbm [thread:$0]  %s261, 128, %s5, [#allocation3]
    $region25: #{tpu_custom_call.1} parent=1 // pred_fallthru
      _
    // Predicated region
    $region26: #{tpu_custom_call.1} parent=1 // pred_check
      _
    $region27: #{tpu_custom_call.1} parent=1 // pred_check_branch
      %265 = sbr.rel (0) target = $region29
    $region28: #{tpu_custom_call.1} parent=1 // pred_region
      %266 = dma.done [#allocation3], 128
    $region29: #{tpu_custom_call.1} parent=1 // pred_fallthru
      _
    %267 = vsyncpa [#allocation3], 1

</llo_original>
